<compile_context>
chip_gen: v7x
topology: tpu7x:2x2x1
jax: 0.10.0
libtpu: 0.0.40
codegen_flags: <defaults>
</compile_context>

<pallas_src>
import functools

import jax
import jax.numpy as jnp
from jax.experimental import pallas as pl
from jax.experimental.pallas import tpu as pltpu


def _mmd_kernel(src_ref, tgt_ref, out_ref, *, kernel_mul, kernel_num,
                m2, tiles_per_shard):
    tile_m2, two_d = src_ref.shape
    d = two_d // 2

    t = pl.program_id(1)

    @pl.when(t == 0)
    def _init():
        out_ref[...] = jnp.zeros_like(out_ref)

    x = src_ref[...].astype(jnp.float32)      # (tile_m2, 2*D) pair rows
    y = tgt_ref[...].astype(jnp.float32)

    xo, xe = x[:, :d], x[:, d:]               # source[2i], source[2i+1]
    yo, ye = y[:, :d], y[:, d:]               # target[2i], target[2i+1]

    def row_sq(a):
        # (tile_m2, D) -> lane-dense (1, tile_m2) per-pair squared L2 so the
        # 4*kernel_num exp chain below uses full 128-lane vregs.
        return jnp.sum(a * a, axis=-1)[None, :]

    l2_xx = row_sq(xo - xe)
    l2_yy = row_sq(yo - ye)
    l2_xy = row_sq(xo - ye)
    l2_yx = row_sq(xe - yo)

    eps = 1e-6
    bw = (l2_xx + l2_yy + l2_xy + l2_yx) * (
        0.25 / (kernel_mul ** (kernel_num // 2)))

    h = jnp.zeros_like(bw)
    for k in range(kernel_num):               # static unroll (kernel_num = 5)
        b = bw * (kernel_mul ** k) + eps
        neg_inv_b = -1.0 / b                  # one reciprocal per bandwidth
        h = (h
             + jnp.exp(l2_xx * neg_inv_b)
             + jnp.exp(l2_yy * neg_inv_b)
             - jnp.exp(l2_xy * neg_inv_b)
             - jnp.exp(l2_yx * neg_inv_b))

    # Mask rows past m2: padded tail tile and/or the duplicated "virtual" tile
    # on the second shard when the tile count is odd.  jnp.where selects, so
    # garbage (even NaN/Inf) cannot leak into the sum.
    tile_idx = pl.program_id(0) * tiles_per_shard + t
    row_ids = tile_idx * tile_m2 + jax.lax.broadcasted_iota(
        jnp.int32, (1, tile_m2), 1)
    h = jnp.where(row_ids < m2, h, 0.0)

    # Accumulate this tile's partial sum into the shard's resident block.
    out_ref[...] = out_ref[...] + jnp.sum(h)


def linear_time_mmd_loss(source, target, kernel_mul=2.0, kernel_num=5,
                         block_rows=None):
    """Pallas implementation of LinearTimeMMDLoss.forward."""
    m, d = source.shape
    if m < 2:
        raise ValueError("LinearTimeMMDLoss needs at least 2 samples.")
    m2 = m // 2

    # Contiguous pair layout (free reshape, no strided HBM copies):
    # row i = [sample 2i | sample 2i+1].
    src = source[: 2 * m2].reshape(m2, 2 * d)
    tgt = target[: 2 * m2].reshape(m2, 2 * d)

    row_bytes = 2 * d * src.dtype.itemsize
    if block_rows is None:
        # ~4 MiB per input block -> 2 inputs x 2 pipeline buffers ~= 16 MiB,
        # safe on v7x's 64 MiB VMEM while big enough to hit the HBM roofline.
        tile = (4 * 1024 * 1024) // max(row_bytes, 1)
        tile = max(8, min(2048, (tile // 8) * 8))
    else:
        tile = max(8, (int(block_rows) // 8) * 8)

    if tile >= m2:
        tile = m2                      # single full-extent block is always legal
        num_tiles = 1
    else:
        num_tiles = pl.cdiv(m2, tile)

    # Shard the tile loop across 2 TensorCores whenever there is more than one
    # tile.  Odd tile counts get one extra "virtual" tile on shard 1 whose
    # rows are masked to zero inside the kernel.
    num_shards = 2 if num_tiles >= 2 else 1
    tiles_per_shard = pl.cdiv(num_tiles, num_shards)
    last_block = num_tiles - 1

    kernel = functools.partial(
        _mmd_kernel,
        kernel_mul=float(kernel_mul),
        kernel_num=int(kernel_num),
        m2=m2,
        tiles_per_shard=tiles_per_shard,
    )

    def in_index_map(s, t):
        # Clamp so the virtual extra tile re-reads the last real block (kept
        # in-bounds); its contribution is masked out in the kernel.
        return (jnp.minimum(s * tiles_per_shard + t, last_block), 0)

    in_spec = pl.BlockSpec((tile, 2 * d), in_index_map)

    out = pl.pallas_call(
        kernel,
        out_shape=jax.ShapeDtypeStruct((num_shards * 8, 128), jnp.float32),
        grid_spec=pltpu.PrefetchScalarGridSpec(
            num_scalar_prefetch=0,
            grid=(num_shards, tiles_per_shard),
            in_specs=[in_spec, in_spec],
            out_specs=pl.BlockSpec((8, 128), lambda s, t: (s, 0)),
        ),
        compiler_params=pltpu.CompilerParams(
            dimension_semantics=("parallel", "arbitrary"),
            vmem_limit_bytes=40 * 1024 * 1024,
        ),
    )(src, tgt)

    # Every element of shard s's (8,128) block equals that shard's partial sum.
    return jnp.sum(out[::8, 0]) / jnp.float32(m2)


def _reference(source, target, kernel_mul=2.0, kernel_num=5):
    """Pure-JAX reference matching the PyTorch module semantics."""
    m = source.shape[0]
    m2 = m // 2
    xo, xe = source[0::2][:m2], source[1::2][:m2]
    yo, ye = target[0::2][:m2], target[1::2][:m2]
    l2_xx = jnp.sum((xo - xe) ** 2, axis=-1)
    l2_yy = jnp.sum((yo - ye) ** 2, axis=-1)
    l2_xy = jnp.sum((xo - ye) ** 2, axis=-1)
    l2_yx = jnp.sum((xe - yo) ** 2, axis=-1)
    bw = (l2_xx + l2_yy + l2_xy + l2_yx) / 4.0 / (kernel_mul ** (kernel_num // 2))
    h = jnp.zeros_like(l2_xx)
    for k in range(kernel_num):
        b = bw * (kernel_mul ** k) + 1e-6
        h = (h + jnp.exp(-l2_xx / b) + jnp.exp(-l2_yy / b)
               - jnp.exp(-l2_xy / b) - jnp.exp(-l2_yx / b))
    return jnp.mean(h)


if __name__ == "__main__":
    key = jax.random.PRNGKey(0)
    k1, k2, k3, k4 = jax.random.split(key, 4)

    # Case 1: tiny single full-block path (batch=8, hidden=32).
    m, d = 8, 32
    src = jax.random.normal(k1, (m, d), dtype=jnp.float32)
    tgt = jax.random.normal(k2, (m, d), dtype=jnp.float32) + 0.5
    out1 = jax.block_until_ready(linear_time_mmd_loss(src, tgt, 2.0, 5))
    ref1 = jax.block_until_ready(_reference(src, tgt, 2.0, 5))
    assert jnp.allclose(out1, ref1, rtol=1e-3, atol=1e-5), (out1, ref1)

    # Case 2: row tiling + 2-shard 'parallel' axis (m2=32 -> 4 tiles of 8).
    m, d = 64, 32
    src = jax.random.normal(k3, (m, d), dtype=jnp.float32)
    tgt = jax.random.normal(k4, (m, d), dtype=jnp.float32) + 0.5
    out2 = jax.block_until_ready(
        linear_time_mmd_loss(src, tgt, 2.0, 5, block_rows=8))
    ref2 = jax.block_until_ready(_reference(src, tgt, 2.0, 5))
    assert jnp.allclose(out2, ref2, rtol=1e-3, atol=1e-5), (out2, ref2)

    # Case 3: odd batch (truncation), ragged tail tile, and odd tile count
    # (m2=35 -> 3 tiles of 16 -> 2 shards with one masked virtual tile).
    m, d = 71, 32
    src = jax.random.normal(k1, (m, d), dtype=jnp.float32)
    tgt = jax.random.normal(k2, (m, d), dtype=jnp.float32) - 0.25
    out3 = jax.block_until_ready(
        linear_time_mmd_loss(src, tgt, 2.0, 5, block_rows=16))
    ref3 = jax.block_until_ready(_reference(src, tgt, 2.0, 5))
    assert jnp.allclose(out3, ref3, rtol=1e-3, atol=1e-5), (out3, ref3)

    print("KERNEL_OK")
</pallas_src>

<mosaic_0001>
module attributes {stable_mosaic.version = 11 : i64} {
  func.func @_mmd_kernel(%arg0: i32, %arg1: i32, %arg2: memref<4x64xf32, #tpu.memory_space<vmem>>, %arg3: memref<4x64xf32, #tpu.memory_space<vmem>>, %arg4: memref<8x128xf32, #tpu.memory_space<vmem>>) attributes {dimension_semantics = [#tpu.dimension_semantics<parallel>, #tpu.dimension_semantics<arbitrary>], iteration_bounds = array<i64: 1, 1>, scalar_prefetch = 0 : i64, scratch_operands = 0 : i64, tpu.core_type = #tpu.core_type<tc>, window_params = [{transform_indices = @transform_0, window_bounds = array<i64: 4, 64>}, {transform_indices = @transform_1, window_bounds = array<i64: 4, 64>}, {transform_indices = @transform_2, window_bounds = array<i64: 8, 128>}]} {
    %c0_i32 = arith.constant 0 : i32
    %0 = arith.cmpi eq, %arg1, %c0_i32 : i32
    %1 = arith.extui %0 : i1 to i32
    %c0_i32_0 = arith.constant 0 : i32
    %2 = arith.cmpi ne, %1, %c0_i32_0 : i32
    scf.if %2 {
      %cst_31 = arith.constant 0.000000e+00 : f32
      %139 = vector.broadcast %cst_31 : f32 to vector<8x128xf32>
      %c0_32 = arith.constant 0 : index
      %c0_33 = arith.constant 0 : index
      %140 = vector.load %arg4[%c0_32, %c0_33] : memref<8x128xf32, #tpu.memory_space<vmem>>, vector<8x128xf32>
      tpu.vector_store %arg4[%c0_32, %c0_33], %139 {strides = array<i32>} : memref<8x128xf32, #tpu.memory_space<vmem>>, vector<8x128xf32>,
    } else {
    }
    %c0 = arith.constant 0 : index
    %c0_1 = arith.constant 0 : index
    %3 = vector.load %arg2[%c0, %c0_1] : memref<4x64xf32, #tpu.memory_space<vmem>>, vector<4x64xf32>
    %c0_2 = arith.constant 0 : index
    %c0_3 = arith.constant 0 : index
    %4 = vector.load %arg3[%c0_2, %c0_3] : memref<4x64xf32, #tpu.memory_space<vmem>>, vector<4x64xf32>
    %5 = vector.extract_strided_slice %3 {offsets = [0, 0], sizes = [4, 32], strides = [1, 1]} : vector<4x64xf32> to vector<4x32xf32>
    %6 = vector.extract_strided_slice %3 {offsets = [0, 32], sizes = [4, 32], strides = [1, 1]} : vector<4x64xf32> to vector<4x32xf32>
    %7 = vector.extract_strided_slice %4 {offsets = [0, 0], sizes = [4, 32], strides = [1, 1]} : vector<4x64xf32> to vector<4x32xf32>
    %8 = vector.extract_strided_slice %4 {offsets = [0, 32], sizes = [4, 32], strides = [1, 1]} : vector<4x64xf32> to vector<4x32xf32>
    %9 = arith.subf %5, %6 : vector<4x32xf32>
    %10 = arith.mulf %9, %9 : vector<4x32xf32>
    %cst = arith.constant dense<0.000000e+00> : vector<4xf32>
    %11 = vector.multi_reduction <add>, %10, %cst [1] : vector<4x32xf32> to vector<4xf32>
    %12 = vector.shape_cast %11 : vector<4xf32> to vector<1x4xf32>
    %13 = arith.subf %7, %8 : vector<4x32xf32>
    %14 = arith.mulf %13, %13 : vector<4x32xf32>
    %cst_4 = arith.constant dense<0.000000e+00> : vector<4xf32>
    %15 = vector.multi_reduction <add>, %14, %cst_4 [1] : vector<4x32xf32> to vector<4xf32>
    %16 = vector.shape_cast %15 : vector<4xf32> to vector<1x4xf32>
    %17 = arith.subf %5, %8 : vector<4x32xf32>
    %18 = arith.mulf %17, %17 : vector<4x32xf32>
    %cst_5 = arith.constant dense<0.000000e+00> : vector<4xf32>
    %19 = vector.multi_reduction <add>, %18, %cst_5 [1] : vector<4x32xf32> to vector<4xf32>
    %20 = vector.shape_cast %19 : vector<4xf32> to vector<1x4xf32>
    %21 = arith.subf %6, %7 : vector<4x32xf32>
    %22 = arith.mulf %21, %21 : vector<4x32xf32>
    %cst_6 = arith.constant dense<0.000000e+00> : vector<4xf32>
    %23 = vector.multi_reduction <add>, %22, %cst_6 [1] : vector<4x32xf32> to vector<4xf32>
    %24 = vector.shape_cast %23 : vector<4xf32> to vector<1x4xf32>
    %25 = arith.addf %12, %16 : vector<1x4xf32>
    %26 = arith.addf %25, %20 : vector<1x4xf32>
    %27 = arith.addf %26, %24 : vector<1x4xf32>
    %cst_7 = arith.constant 6.250000e-02 : f32
    %28 = vector.broadcast %cst_7 : f32 to vector<1x4xf32>
    %29 = arith.mulf %27, %28 : vector<1x4xf32>
    %cst_8 = arith.constant 0.000000e+00 : f32
    %30 = vector.broadcast %cst_8 : f32 to vector<1x4xf32>
    %cst_9 = arith.constant 1.000000e+00 : f32
    %31 = vector.broadcast %cst_9 : f32 to vector<1x4xf32>
    %32 = arith.mulf %29, %31 : vector<1x4xf32>
    %cst_10 = arith.constant 9.99999997E-7 : f32
    %33 = vector.broadcast %cst_10 : f32 to vector<1x4xf32>
    %34 = arith.addf %32, %33 : vector<1x4xf32>
    %cst_11 = arith.constant -1.000000e+00 : f32
    %35 = vector.broadcast %cst_11 : f32 to vector<1x4xf32>
    %36 = arith.divf %35, %34 : vector<1x4xf32>
    %37 = arith.mulf %12, %36 : vector<1x4xf32>
    %38 = math.exp %37 : vector<1x4xf32>
    %39 = arith.addf %30, %38 : vector<1x4xf32>
    %40 = arith.mulf %16, %36 : vector<1x4xf32>
    %41 = math.exp %40 : vector<1x4xf32>
    %42 = arith.addf %39, %41 : vector<1x4xf32>
    %43 = arith.mulf %20, %36 : vector<1x4xf32>
    %44 = math.exp %43 : vector<1x4xf32>
    %45 = arith.subf %42, %44 : vector<1x4xf32>
    %46 = arith.mulf %24, %36 : vector<1x4xf32>
    %47 = math.exp %46 : vector<1x4xf32>
    %48 = arith.subf %45, %47 : vector<1x4xf32>
    %cst_12 = arith.constant 2.000000e+00 : f32
    %49 = vector.broadcast %cst_12 : f32 to vector<1x4xf32>
    %50 = arith.mulf %29, %49 : vector<1x4xf32>
    %cst_13 = arith.constant 9.99999997E-7 : f32
    %51 = vector.broadcast %cst_13 : f32 to vector<1x4xf32>
    %52 = arith.addf %50, %51 : vector<1x4xf32>
    %cst_14 = arith.constant -1.000000e+00 : f32
    %53 = vector.broadcast %cst_14 : f32 to vector<1x4xf32>
    %54 = arith.divf %53, %52 : vector<1x4xf32>
    %55 = arith.mulf %12, %54 : vector<1x4xf32>
    %56 = math.exp %55 : vector<1x4xf32>
    %57 = arith.addf %48, %56 : vector<1x4xf32>
    %58 = arith.mulf %16, %54 : vector<1x4xf32>
    %59 = math.exp %58 : vector<1x4xf32>
    %60 = arith.addf %57, %59 : vector<1x4xf32>
    %61 = arith.mulf %20, %54 : vector<1x4xf32>
    %62 = math.exp %61 : vector<1x4xf32>
    %63 = arith.subf %60, %62 : vector<1x4xf32>
    %64 = arith.mulf %24, %54 : vector<1x4xf32>
    %65 = math.exp %64 : vector<1x4xf32>
    %66 = arith.subf %63, %65 : vector<1x4xf32>
    %cst_15 = arith.constant 4.000000e+00 : f32
    %67 = vector.broadcast %cst_15 : f32 to vector<1x4xf32>
    %68 = arith.mulf %29, %67 : vector<1x4xf32>
    %cst_16 = arith.constant 9.99999997E-7 : f32
    %69 = vector.broadcast %cst_16 : f32 to vector<1x4xf32>
    %70 = arith.addf %68, %69 : vector<1x4xf32>
    %cst_17 = arith.constant -1.000000e+00 : f32
    %71 = vector.broadcast %cst_17 : f32 to vector<1x4xf32>
    %72 = arith.divf %71, %70 : vector<1x4xf32>
    %73 = arith.mulf %12, %72 : vector<1x4xf32>
    %74 = math.exp %73 : vector<1x4xf32>
    %75 = arith.addf %66, %74 : vector<1x4xf32>
    %76 = arith.mulf %16, %72 : vector<1x4xf32>
    %77 = math.exp %76 : vector<1x4xf32>
    %78 = arith.addf %75, %77 : vector<1x4xf32>
    %79 = arith.mulf %20, %72 : vector<1x4xf32>
    %80 = math.exp %79 : vector<1x4xf32>
    %81 = arith.subf %78, %80 : vector<1x4xf32>
    %82 = arith.mulf %24, %72 : vector<1x4xf32>
    %83 = math.exp %82 : vector<1x4xf32>
    %84 = arith.subf %81, %83 : vector<1x4xf32>
    %cst_18 = arith.constant 8.000000e+00 : f32
    %85 = vector.broadcast %cst_18 : f32 to vector<1x4xf32>
    %86 = arith.mulf %29, %85 : vector<1x4xf32>
    %cst_19 = arith.constant 9.99999997E-7 : f32
    %87 = vector.broadcast %cst_19 : f32 to vector<1x4xf32>
    %88 = arith.addf %86, %87 : vector<1x4xf32>
    %cst_20 = arith.constant -1.000000e+00 : f32
    %89 = vector.broadcast %cst_20 : f32 to vector<1x4xf32>
    %90 = arith.divf %89, %88 : vector<1x4xf32>
    %91 = arith.mulf %12, %90 : vector<1x4xf32>
    %92 = math.exp %91 : vector<1x4xf32>
    %93 = arith.addf %84, %92 : vector<1x4xf32>
    %94 = arith.mulf %16, %90 : vector<1x4xf32>
    %95 = math.exp %94 : vector<1x4xf32>
    %96 = arith.addf %93, %95 : vector<1x4xf32>
    %97 = arith.mulf %20, %90 : vector<1x4xf32>
    %98 = math.exp %97 : vector<1x4xf32>
    %99 = arith.subf %96, %98 : vector<1x4xf32>
    %100 = arith.mulf %24, %90 : vector<1x4xf32>
    %101 = math.exp %100 : vector<1x4xf32>
    %102 = arith.subf %99, %101 : vector<1x4xf32>
    %cst_21 = arith.constant 1.600000e+01 : f32
    %103 = vector.broadcast %cst_21 : f32 to vector<1x4xf32>
    %104 = arith.mulf %29, %103 : vector<1x4xf32>
    %cst_22 = arith.constant 9.99999997E-7 : f32
    %105 = vector.broadcast %cst_22 : f32 to vector<1x4xf32>
    %106 = arith.addf %104, %105 : vector<1x4xf32>
    %cst_23 = arith.constant -1.000000e+00 : f32
    %107 = vector.broadcast %cst_23 : f32 to vector<1x4xf32>
    %108 = arith.divf %107, %106 : vector<1x4xf32>
    %109 = arith.mulf %12, %108 : vector<1x4xf32>
    %110 = math.exp %109 : vector<1x4xf32>
    %111 = arith.addf %102, %110 : vector<1x4xf32>
    %112 = arith.mulf %16, %108 : vector<1x4xf32>
    %113 = math.exp %112 : vector<1x4xf32>
    %114 = arith.addf %111, %113 : vector<1x4xf32>
    %115 = arith.mulf %20, %108 : vector<1x4xf32>
    %116 = math.exp %115 : vector<1x4xf32>
    %117 = arith.subf %114, %116 : vector<1x4xf32>
    %118 = arith.mulf %24, %108 : vector<1x4xf32>
    %119 = math.exp %118 : vector<1x4xf32>
    %120 = arith.subf %117, %119 : vector<1x4xf32>
    %c1_i32 = arith.constant 1 : i32
    %121 = arith.muli %arg0, %c1_i32 : i32
    %122 = arith.addi %121, %arg1 : i32
    %c4_i32 = arith.constant 4 : i32
    %123 = arith.muli %122, %c4_i32 : i32
    %124 = tpu.iota {dimensions = array<i32: 1>} : vector<1x4xi32>
    %125 = vector.broadcast %123 : i32 to vector<1x4xi32>
    %126 = arith.addi %125, %124 : vector<1x4xi32>
    %c4_i32_24 = arith.constant 4 : i32
    %127 = vector.broadcast %c4_i32_24 : i32 to vector<1x4xi32>
    %128 = arith.cmpi slt, %126, %127 : vector<1x4xi32>
    %cst_25 = arith.constant 0.000000e+00 : f32
    %129 = vector.broadcast %cst_25 : f32 to vector<1x4xf32>
    %130 = arith.select %128, %120, %129 : vector<1x4xi1>, vector<1x4xf32>
    %c0_26 = arith.constant 0 : index
    %c0_27 = arith.constant 0 : index
    %131 = vector.load %arg4[%c0_26, %c0_27] : memref<8x128xf32, #tpu.memory_space<vmem>>, vector<8x128xf32>
    %132 = vector.shape_cast %130 : vector<1x4xf32> to vector<1x1x4xf32>
    %cst_28 = arith.constant dense<0.000000e+00> : vector<1xf32>
    %133 = vector.multi_reduction <add>, %132, %cst_28 [1, 2] : vector<1x1x4xf32> to vector<1xf32>
    %134 = vector.shape_cast %133 : vector<1xf32> to vector<1x1x1xf32>
    %135 = vector.extract %134[0, 0, 0] : f32 from vector<1x1x1xf32>
    %136 = vector.broadcast %135 : f32 to vector<8x128xf32>
    %137 = arith.addf %131, %136 : vector<8x128xf32>
    %c0_29 = arith.constant 0 : index
    %c0_30 = arith.constant 0 : index
    %138 = vector.load %arg4[%c0_29, %c0_30] : memref<8x128xf32, #tpu.memory_space<vmem>>, vector<8x128xf32>
    tpu.vector_store %arg4[%c0_29, %c0_30], %137 {strides = array<i32>} : memref<8x128xf32, #tpu.memory_space<vmem>>, vector<8x128xf32>,
    return
  }
  func.func @transform_0(%arg0: i32, %arg1: i32) -> (i32, i32) {
    %c1_i32 = arith.constant 1 : i32
    %0 = arith.muli %arg0, %c1_i32 : i32
    %1 = arith.addi %0, %arg1 : i32
    %c0_i32 = arith.constant 0 : i32
    %2 = arith.minsi %1, %c0_i32 : i32
    %c0_i32_0 = arith.constant 0 : i32
    %c0_i32_1 = arith.constant 0 : i32
    return %2, %c0_i32_0 : i32, i32
  }
  func.func @transform_1(%arg0: i32, %arg1: i32) -> (i32, i32) {
    %c1_i32 = arith.constant 1 : i32
    %0 = arith.muli %arg0, %c1_i32 : i32
    %1 = arith.addi %0, %arg1 : i32
    %c0_i32 = arith.constant 0 : i32
    %2 = arith.minsi %1, %c0_i32 : i32
    %c0_i32_0 = arith.constant 0 : i32
    %c0_i32_1 = arith.constant 0 : i32
    return %2, %c0_i32_0 : i32, i32
  }
  func.func @transform_2(%arg0: i32, %arg1: i32) -> (i32, i32) {
    %c0_i32 = arith.constant 0 : i32
    %c0_i32_0 = arith.constant 0 : i32
    return %arg0, %c0_i32 : i32, i32
  }
}

</mosaic_0001>

<llo_original>
// kernel: tpu_custom_call.1
$region0: #{tpu_custom_call.1}
  #allocation0 [shape = 'u32[]', space=smem, size = 0x4, offset = 0x4, fixed_abs, tag = 'smem constant byte address 0x4 - core index']
  #allocation1 [shape = 'u32[144,128]{1,0:T(1,128)}', space=vmem, size = 0x12000, scoped, tag = 'internal scratch']
  %s0 = inlined_call_operand.hbm [shape: f32[4,64], index: 0, kind: input, shape index: {}]
  %s1 = inlined_call_operand.hbm [shape: f32[4,64], index: 1, kind: input, shape index: {}]
  %s2 = inlined_call_operand.hbm [shape: f32[8,128], index: 2, kind: output, shape index: {}]
  %s3 = sld [smem:[#allocation0]]
  $region30: #{tpu_custom_call.1} parent=0
    _
  %s5 = ssub.s32 1, %s3
  %s6 = scalar_select 0, %s5, %s3
  $region1: #{tpu_custom_call.1} parent=0
    #allocation2 [shape = 'u8[2048]{0}', space=vmem, size = 0x800, scoped, tag = 'input window, operand 0, single buffered']
    #allocation3 [shape = 's32[1]{0}', space=sflag, size = 0x4, scoped, tag = 'scoped memory for tpu_custom_call.1']
    #allocation4 [shape = 's32[1]{0}', space=sflag, size = 0x4, scoped, tag = 'scoped memory for tpu_custom_call.1']
    #allocation5 [shape = 'u8[2048]{0}', space=vmem, size = 0x800, scoped, tag = 'input window, operand 1, single buffered']
    #allocation6 [shape = 's32[1]{0}', space=sflag, size = 0x4, scoped, tag = 'scoped memory for tpu_custom_call.1']
    #allocation7 [shape = 'u8[4096]{0}', space=vmem, size = 0x1000, scoped, tag = 'output window, operand 0, single buffered']
    %7 = vsyncpa [#allocation3], 0
    %8 = vsyncpa [#allocation6], 0
    %9 = vsyncpa [#allocation4], 0
    // Predicated region
    $region2: #{tpu_custom_call.1} parent=1 // pred_check
      _
    $region3: #{tpu_custom_call.1} parent=1 // pred_check_branch
      %11 = sbr.rel (0) target = $region5
    $region4: #{tpu_custom_call.1} parent=1 // pred_region
      %s12 = sadd.s32 0, 0
      %p13 = scmp.lt.s32.totalorder %s12, 0
      %s14 = scalar_select %p13, %s12, 0
      %s16 = ssub.s32 64, 64
      %17 = vsyncadd [#allocation3], %s16
      %s18 = smul.addr %s14, 64
      %s19 = scalar_lea.hbm %s0, %s18
      %s21 = sshll.u32 [#allocation2], 4
      %s22 = int_to_ptr.vmem [resolvable:$true] %s21
      %24 = dma.hbm_to_vmem [thread:$0]  %s19, 64, %s22, [#allocation3]
    $region5: #{tpu_custom_call.1} parent=1 // pred_fallthru
      _
    // Predicated region
    $region6: #{tpu_custom_call.1} parent=1 // pred_check
      _
    $region7: #{tpu_custom_call.1} parent=1 // pred_check_branch
      %26 = sbr.rel (0) target = $region9
    $region8: #{tpu_custom_call.1} parent=1 // pred_region
      %s27 = sadd.s32 0, 0
      %p28 = scmp.lt.s32.totalorder %s27, 0
      %s29 = scalar_select %p28, %s27, 0
      %s31 = ssub.s32 64, 64
      %32 = vsyncadd [#allocation6], %s31
      %s33 = smul.addr %s29, 64
      %s34 = scalar_lea.hbm %s1, %s33
      %s36 = sshll.u32 [#allocation5], 4
      %s37 = int_to_ptr.vmem [resolvable:$true] %s36
      %39 = dma.hbm_to_vmem [thread:$0]  %s34, 64, %s37, [#allocation6]
    $region9: #{tpu_custom_call.1} parent=1 // pred_fallthru
      _
    // Predicated region
    $region10: #{tpu_custom_call.1} parent=1 // pred_check
      _
    $region11: #{tpu_custom_call.1} parent=1 // pred_check_branch
      %41 = sbr.rel (0) target = $region13
    $region12: #{tpu_custom_call.1} parent=1 // pred_region
      %42 = dma.done [#allocation3], 64
    $region13: #{tpu_custom_call.1} parent=1 // pred_fallthru
      _
    // Predicated region
    $region14: #{tpu_custom_call.1} parent=1 // pred_check
      _
    $region15: #{tpu_custom_call.1} parent=1 // pred_check_branch
      %44 = sbr.rel (0) target = $region17
    $region16: #{tpu_custom_call.1} parent=1 // pred_region
      %45 = dma.done [#allocation6], 64
    $region17: #{tpu_custom_call.1} parent=1 // pred_fallthru
      _
    %s46 = sadd.s32 0, 0
    %p47 = scmp.lt.s32.totalorder %s46, 0
    %s48 = scalar_select %p47, %s46, 0
    %s49 = sadd.s32 0, 0
    %p50 = scmp.lt.s32.totalorder %s49, 0
    %s51 = scalar_select %p50, %s49, 0
    %p52 = scmp.eq.s32.totalorder 0, 0
    // Predicated region
    $region18: #{tpu_custom_call.1} parent=1 // pred_check
      %p53 = pneg %p52
    $region19: #{tpu_custom_call.1} parent=1 // pred_check_branch
      %55 = sbr.rel (%p53) target = $region21
    $region20: #{tpu_custom_call.1} parent=1 // pred_region
      %56 = vst [vmem:[#allocation7] sm:$0xff] 0.0
    $region21: #{tpu_custom_call.1} parent=1 // pred_fallthru
      _
    %v57 = vld [vmem:[#allocation2] sm:$0xf]
    %v58 = vld [vmem:[#allocation5] sm:$0xf]
    %60 = vrot.lane.b32.xlu0 %v57, 96
    %v61 = vpop.permute.xlu0 %60
    %v63 = vsub.f32 %v57, %v61
    %v64 = vmul.f32 %v63, %v63
    %vm65 = vcmask 257024
    %v66 = vsel %vm65, %v64, 0.0
    %67 = vadd.xlane.f32.xlu0 %v66
    %v68 = vpop.xlane.xlu0 %67
    %70 = vrot.lane.b32.xlu0 %v58, 96
    %v71 = vpop.permute.xlu0 %70
    %v73 = vsub.f32 %v58, %v71
    %v74 = vmul.f32 %v73, %v73
    %v75 = vsel %vm65, %v74, 0.0
    %76 = vadd.xlane.f32.xlu0 %v75
    %v77 = vpop.xlane.xlu0 %76
    %v78 = vsub.f32 %v57, %v71
    %v79 = vmul.f32 %v78, %v78
    %v80 = vsel %vm65, %v79, 0.0
    %81 = vadd.xlane.f32.xlu0 %v80
    %v82 = vpop.xlane.xlu0 %81
    %83 = vrot.lane.b32.xlu0 %v58, 32
    %v84 = vpop.permute.xlu0 %83
    %v86 = vsub.f32 %v57, %v84
    %v87 = vmul.f32 %v86, %v86
    %89 = vrot.lane.b32.xlu0 %v87, 96
    %v90 = vpop.permute.xlu0 %89
    %v92 = vsel %vm65, %v90, 0.0
    %93 = vadd.xlane.f32.xlu0 %v92
    %v94 = vpop.xlane.xlu0 %93
    %v95 = vadd.f32 %v68, %v77
    %v96 = vadd.f32 %v95, %v82
    %v97 = vadd.f32 %v96, %v94
    %v98 = vmul.f32 %v97, 0.0625
    %v99 = vadd.f32 %v98, 1e-06
    %v100 = vrcp.pop %v99
    %v101 = vmul.f32 -1.0, %v100
    %v102 = vmul.f32 %v68, %v101
    %v103 = vmul.f32 %v102, 1.442695
    %v104 = vpow.pop %v103
    %v105 = vadd.f32 %v104, 0.0
    %v106 = vmul.f32 %v77, %v101
    %v107 = vmul.f32 %v106, 1.442695
    %v108 = vpow.pop %v107
    %v109 = vadd.f32 %v105, %v108
    %v110 = vmul.f32 %v82, %v101
    %v111 = vmul.f32 %v110, 1.442695
    %v112 = vpow.pop %v111
    %v113 = vsub.f32 %v109, %v112
    %v114 = vmul.f32 %v94, %v101
    %v115 = vmul.f32 %v114, 1.442695
    %v116 = vpow.pop %v115
    %v117 = vsub.f32 %v113, %v116
    %v118 = vmul.f32 %v98, 2.0
    %v119 = vadd.f32 %v118, 1e-06
    %v120 = vrcp.pop %v119
    %v121 = vmul.f32 -1.0, %v120
    %v122 = vmul.f32 %v68, %v121
    %v123 = vmul.f32 %v122, 1.442695
    %v124 = vpow.pop %v123
    %v125 = vadd.f32 %v117, %v124
    %v126 = vmul.f32 %v77, %v121
    %v127 = vmul.f32 %v126, 1.442695
    %v128 = vpow.pop %v127
    %v129 = vadd.f32 %v125, %v128
    %v130 = vmul.f32 %v82, %v121
    %v131 = vmul.f32 %v130, 1.442695
    %v132 = vpow.pop %v131
    %v133 = vsub.f32 %v129, %v132
    %v134 = vmul.f32 %v94, %v121
    %v135 = vmul.f32 %v134, 1.442695
    %v136 = vpow.pop %v135
    %v137 = vsub.f32 %v133, %v136
    %v138 = vmul.f32 %v98, 4.0
    %v139 = vadd.f32 %v138, 1e-06
    %v140 = vrcp.pop %v139
    %v141 = vmul.f32 -1.0, %v140
    %v142 = vmul.f32 %v68, %v141
    %v143 = vmul.f32 %v142, 1.442695
    %v144 = vpow.pop %v143
    %v145 = vadd.f32 %v137, %v144
    %v146 = vmul.f32 %v77, %v141
    %v147 = vmul.f32 %v146, 1.442695
    %v148 = vpow.pop %v147
    %v149 = vadd.f32 %v145, %v148
    %v150 = vmul.f32 %v82, %v141
    %v151 = vmul.f32 %v150, 1.442695
    %v152 = vpow.pop %v151
    %v153 = vsub.f32 %v149, %v152
    %v154 = vmul.f32 %v94, %v141
    %v155 = vmul.f32 %v154, 1.442695
    %v156 = vpow.pop %v155
    %v157 = vsub.f32 %v153, %v156
    %v158 = vmul.f32 %v98, 8.0
    %v159 = vadd.f32 %v158, 1e-06
    %v160 = vrcp.pop %v159
    %v161 = vmul.f32 -1.0, %v160
    %v162 = vmul.f32 %v68, %v161
    %v163 = vmul.f32 %v162, 1.442695
    %v164 = vpow.pop %v163
    %v165 = vadd.f32 %v157, %v164
    %v166 = vmul.f32 %v77, %v161
    %v167 = vmul.f32 %v166, 1.442695
    %v168 = vpow.pop %v167
    %v169 = vadd.f32 %v165, %v168
    %v170 = vmul.f32 %v82, %v161
    %v171 = vmul.f32 %v170, 1.442695
    %v172 = vpow.pop %v171
    %v173 = vsub.f32 %v169, %v172
    %v174 = vmul.f32 %v94, %v161
    %v175 = vmul.f32 %v174, 1.442695
    %v176 = vpow.pop %v175
    %v177 = vsub.f32 %v173, %v176
    %v178 = vmul.f32 %v98, 16.0
    %v179 = vadd.f32 %v178, 1e-06
    %v180 = vrcp.pop %v179
    %v181 = vmul.f32 -1.0, %v180
    %v182 = vmul.f32 %v68, %v181
    %v183 = vmul.f32 %v182, 1.442695
    %v184 = vpow.pop %v183
    %v185 = vadd.f32 %v177, %v184
    %v186 = vmul.f32 %v77, %v181
    %v187 = vmul.f32 %v186, 1.442695
    %v188 = vpow.pop %v187
    %v189 = vadd.f32 %v185, %v188
    %v190 = vmul.f32 %v82, %v181
    %v191 = vmul.f32 %v190, 1.442695
    %v192 = vpow.pop %v191
    %v193 = vsub.f32 %v189, %v192
    %v194 = vmul.f32 %v94, %v181
    %v195 = vmul.f32 %v194, 1.442695
    %v196 = vpow.pop %v195
    %v197 = vsub.f32 %v193, %v196
    %s198 = sadd.s32 0, 0
    %s199 = smul.u32 %s198, 4
    %v200 = vlaneseq
    %v201 = vand.u32 %v200, 127
    %v202 = vstv %s199
    %v203 = vadd.s32 %v202, %v201
    %vm204 = vcmp.lt.s32.totalorder %v203, 4
    %v206 = vlaneseq
    %v207 = vshrl.u32 %v206, 7
    %v208 = vsub.s32 %v201, %v207
    %v209 = vrot.slane %v197, %v208
    %v211 = vsel %vm204, %v209, 0.0
    %v212 = vld [vmem:[#allocation7] sm:$0xff]
    %vm213 = vcmask 24576
    %v214 = vsel %vm213, %v211, 0.0
    %215 = vadd.xlane.f32.xlu0 %v214
    %v216 = vpop.xlane.xlu0 %215
    %v217 = vrot.slane %v216, 4
    %v218 = vadd.f32 %v216, %v217
    %v219 = vrot.slane %v218, 2
    %v220 = vadd.f32 %v218, %v219
    %v221 = vrot.slane %v220, 1
    %v222 = vadd.f32 %v220, %v221
    %s223 = vtos %v222
    %v224 = vstv %s223
    %v225 = vadd.f32 %v212, %v224
    %226 = vst [vmem:[#allocation7] sm:$0xff] %v225
    // Predicated region
    $region22: #{tpu_custom_call.1} parent=1 // pred_check
      _
    $region23: #{tpu_custom_call.1} parent=1 // pred_check_branch
      %228 = sbr.rel (0) target = $region25
    $region24: #{tpu_custom_call.1} parent=1 // pred_region
      %s230 = ssub.s32 128, 128
      %231 = vsyncadd [#allocation4], %s230
      %s233 = sshll.u32 [#allocation7], 4
      %s234 = int_to_ptr.vmem [resolvable:$true] %s233
      %236 = dma.vmem_to_hbm [thread:$0]  %s234, 128, %s2, [#allocation4]
    $region25: #{tpu_custom_call.1} parent=1 // pred_fallthru
      _
    // Predicated region
    $region26: #{tpu_custom_call.1} parent=1 // pred_check
      _
    $region27: #{tpu_custom_call.1} parent=1 // pred_check_branch
      %238 = sbr.rel (0) target = $region29
    $region28: #{tpu_custom_call.1} parent=1 // pred_region
      %239 = dma.done [#allocation4], 128
    $region29: #{tpu_custom_call.1} parent=1 // pred_fallthru
      _
    %240 = vsyncpa [#allocation3], 1
    %241 = vsyncpa [#allocation6], 1
    %242 = vsyncpa [#allocation4], 1

</llo_original>
